<compile_context>
chip_gen: v5e
topology: v5e:2x2
jax: 0.10.0
libtpu: 0.0.40
codegen_flags: <defaults>
</compile_context>

<pallas_src>
import numpy as np
import jax
import jax.numpy as jnp
from jax.experimental import pallas as pl
from jax.experimental.pallas import tpu as pltpu


def _round_up(x, m):
    return ((x + m - 1) // m) * m


# ----------------------------------------------------------------------------
# Kernel 1: fused, type-batched linear   y[t] = x[t] @ wt[t] + b[t]
# (x / wt arrive pre-cast to bf16; MXU accumulates in f32.)
# ----------------------------------------------------------------------------
def _fused_linear_kernel(x_ref, wt_ref, b_ref, o_ref):
    y = jnp.dot(x_ref[0], wt_ref[0], preferred_element_type=jnp.float32)
    o_ref[0] = y + b_ref[0]                 # bias broadcast (1, d_out)


def fused_linear(xs, wts, bs, *, row_tile=None):
    """xs: (T, Npad, Din) bf16, wts: (T, Din, Dout) bf16, bs: (T, 1, Dout) f32
       -> (T, Npad, Dout) f32."""
    t, n_pad, d_in = xs.shape
    d_out = wts.shape[-1]
    if row_tile is None:
        # v6e/v7x MXU is 256 wide: use large M blocks whenever the data allows.
        row_tile = n_pad if n_pad <= 512 else 512
    assert n_pad % row_tile == 0
    grid = (t, n_pad // row_tile)
    return pl.pallas_call(
        _fused_linear_kernel,
        out_shape=jax.ShapeDtypeStruct((t, n_pad, d_out), jnp.float32),
        grid=grid,
        in_specs=[
            pl.BlockSpec((1, row_tile, d_in), lambda ti, ri: (ti, ri, 0)),
            pl.BlockSpec((1, d_in, d_out), lambda ti, ri: (ti, 0, 0)),
            pl.BlockSpec((1, 1, d_out), lambda ti, ri: (ti, 0, 0)),
        ],
        out_specs=pl.BlockSpec((1, row_tile, d_out), lambda ti, ri: (ti, ri, 0)),
        compiler_params=pltpu.CompilerParams(
            dimension_semantics=("parallel", "parallel"),
            vmem_limit_bytes=48 * 1024 * 1024,
        ),
    )(xs, wts, bs)


# ----------------------------------------------------------------------------
# Kernel 2: graph attention, flash-style online softmax over src tiles
# ----------------------------------------------------------------------------
def _attention_kernel(q_ref, k_ref, v_ref, e_ref, mask_ref, w1_ref, o_ref,
                      m_sc, l_sc, acc_sc):
    sj = pl.program_id(1)

    @pl.when(sj == 0)
    def _():
        m_sc[...] = jnp.full(m_sc.shape, -1e30, m_sc.dtype)
        l_sc[...] = jnp.zeros(l_sc.shape, l_sc.dtype)
        acc_sc[...] = jnp.zeros(acc_sc.shape, acc_sc.dtype)

    d = q_ref.shape[-1]
    scale = 1.0 / (float(d) ** 0.5)
    q = q_ref[...] * scale               # (H, Td, D) f32; 1/sqrt(D) folded into q once
    k = k_ref[...]                       # (H, Ts, D) f32
    e = e_ref[...].astype(jnp.float32)   # (H, Td, D, Ts)  bf16 HBM stream -> f32 math
    mask = mask_ref[...]                 # (Td, Ts)  1.0 = valid typed edge

    # q.k on the MXU (bf16 operands, f32 accumulation).
    s = jnp.einsum("htd,hsd->hts",
                   q.astype(jnp.bfloat16), k.astype(jnp.bfloat16),
                   preferred_element_type=jnp.float32)
    # q.e: sublane-direction reduce over D, lane-dense (Ts on lanes).
    s = s + jnp.sum(q[:, :, :, None] * e, axis=2)                      # (H,Td,Ts)
    # Mask BEFORE the running max so invalid / padded columns cannot inflate
    # the stabilizer (finite -1e30 bias: no inf-inf NaNs).
    s = s + ((mask - 1.0) * 1e30)[None, :, :]

    m_prev = m_sc[...]                                                  # (H,Td,1)
    m_new = jnp.maximum(m_prev, jnp.max(s, axis=-1, keepdims=True))
    alpha = jnp.exp(m_prev - m_new)
    p = jnp.exp(s - m_new) * mask[None, :, :]                           # exact zeros
    l_sc[...] = alpha * l_sc[...] + jnp.sum(p, axis=-1, keepdims=True)

    v = v_ref[...]                                                      # (H,Ts,D)
    pv = jnp.einsum("hts,hsd->htd",
                    p.astype(jnp.bfloat16), v.astype(jnp.bfloat16),
                    preferred_element_type=jnp.float32)
    pe = jnp.sum(p[:, :, None, :] * e, axis=3)                          # lane (XLU) reduce over Ts
    acc_sc[...] = alpha * acc_sc[...] + pv + pe
    m_sc[...] = m_new

    @pl.when(sj == pl.num_programs(1) - 1)
    def _():
        l = l_sc[...]
        inv = pl.reciprocal(jnp.where(l > 0.0, l, 1.0), approx=True)    # EUP
        res = acc_sc[...] * inv                                         # (H, Td, D)
        h = res.shape[0]
        # Relayout to a lane-dense (Td, H*D=hidden) slab once per dst tile ->
        # single full-width store, lane-dense residual add.
        res2d = jnp.concatenate([res[i] for i in range(h)], axis=-1)
        o_ref[...] = w1_ref[...] + res2d                                # residual


def pallas_attention(qg, kg, vg, e_dense, mask, w1g, *, tile_dst, tile_src):
    h, n_pad, d = qg.shape
    hidden = h * d
    assert n_pad % tile_dst == 0 and n_pad % tile_src == 0
    grid = (n_pad // tile_dst, n_pad // tile_src)
    cost = pl.CostEstimate(
        flops=int(8 * h * n_pad * n_pad * d),
        transcendentals=int(2 * h * n_pad * n_pad),
        bytes_accessed=int(2 * e_dense.size
                           + 4 * (qg.size + kg.size + vg.size + w1g.size
                                  + mask.size + n_pad * hidden)),
    )
    return pl.pallas_call(
        _attention_kernel,
        out_shape=jax.ShapeDtypeStruct((n_pad, hidden), jnp.float32),
        grid_spec=pltpu.PrefetchScalarGridSpec(
            num_scalar_prefetch=0,
            grid=grid,
            in_specs=[
                pl.BlockSpec((h, tile_dst, d), lambda i, j: (0, i, 0)),           # q
                pl.BlockSpec((h, tile_src, d), lambda i, j: (0, j, 0)),           # k
                pl.BlockSpec((h, tile_src, d), lambda i, j: (0, j, 0)),           # v
                pl.BlockSpec((h, tile_dst, d, tile_src),
                             lambda i, j: (0, i, 0, j)),                           # e (bf16, lane-dense)
                pl.BlockSpec((tile_dst, tile_src), lambda i, j: (i, j)),           # mask
                pl.BlockSpec((tile_dst, hidden), lambda i, j: (i, 0)),             # w1 (lane-dense)
            ],
            out_specs=pl.BlockSpec((tile_dst, hidden), lambda i, j: (i, 0)),
            scratch_shapes=[
                pltpu.VMEM((h, tile_dst, 1), jnp.float32),   # running max
                pltpu.VMEM((h, tile_dst, 1), jnp.float32),   # running denom
                pltpu.VMEM((h, tile_dst, d), jnp.float32),   # running acc
            ],
        ),
        compiler_params=pltpu.CompilerParams(
            dimension_semantics=("parallel", "arbitrary"),
            # 48 MiB: fits 256-wide bf16 e tiles (8 MiB, double-buffered) on
            # v5e/v6e while staying inside v7x's 64 MiB/TC VMEM budget.
            vmem_limit_bytes=48 * 1024 * 1024,
        ),
        cost_estimate=cost,
    )(qg, kg, vg, e_dense, mask, w1g)


# ----------------------------------------------------------------------------
# Host-side graph bookkeeping (mirrors the reference's python lookups)
# ----------------------------------------------------------------------------
def _find_node_type(global_idx, node_index_dict):
    for t, idxs in node_index_dict.items():
        if global_idx in idxs:
            return t, idxs.index(global_idx)
    return None, None


def _find_edge_type(edge_tuple, edge_index_dict):
    for et, lst in edge_index_dict.items():
        if edge_tuple in lst:
            return et, lst.index(edge_tuple)
    return None, None


# ----------------------------------------------------------------------------
# Forward pass (Pallas-backed)
# ----------------------------------------------------------------------------
def hetero_attention_forward(X, node_index_dict, A, E, edge_index_dict, params,
                             num_heads, head_dim):
    hidden = num_heads * head_dim
    A_np = np.asarray(A)
    n_total = A_np.shape[0]
    node_types = list(X.keys())
    edge_types = list(E.keys())

    # 1) fused projections: one call for all node types (W1..W4 concatenated),
    #    one call for all edge types (W5).  bf16 activations/weights, f32 acc.
    n_counts = {t: np.asarray(X[t]).shape[0] for t in node_types}
    max_n = _round_up(max(n_counts.values()), 16)
    xs = jnp.stack([
        jnp.pad(jnp.asarray(X[t], jnp.float32), ((0, max_n - n_counts[t]), (0, 0)))
        for t in node_types]).astype(jnp.bfloat16)                       # (T, max_n, hidden)
    wts = jnp.stack([
        jnp.concatenate([jnp.asarray(params[name][t][0], jnp.float32).T
                         for name in ("W1", "W2", "W3", "W4")], axis=1)
        for t in node_types]).astype(jnp.bfloat16)                       # (T, hidden, 4*hidden)
    bs = jnp.stack([
        jnp.concatenate([jnp.asarray(params[name][t][1], jnp.float32)
                         for name in ("W1", "W2", "W3", "W4")])[None, :]
        for t in node_types])                                            # (T, 1, 4*hidden)
    proj_nodes = fused_linear(xs, wts, bs)                               # (T, max_n, 4*hidden)

    e_counts = {et: np.asarray(E[et]).shape[0] for et in edge_types}
    max_e = _round_up(max(e_counts.values()), 16)
    es = jnp.stack([
        jnp.pad(jnp.asarray(E[et], jnp.float32), ((0, max_e - e_counts[et]), (0, 0)))
        for et in edge_types]).astype(jnp.bfloat16)
    ewts = jnp.stack([jnp.asarray(params["W5"][et][0], jnp.float32).T
                      for et in edge_types]).astype(jnp.bfloat16)
    ebs = jnp.stack([jnp.asarray(params["W5"][et][1], jnp.float32)[None, :]
                     for et in edge_types])
    proj_edges = fused_linear(es, ewts, ebs)                             # (Te, max_e, hidden)

    # 2) tiling: src tiles must be a multiple of 128 lanes or cover the full
    #    axis; keep >=2 dst tiles when possible (v7x has 2 TensorCores).
    if n_total <= 512:
        n_pad = _round_up(n_total, 16)
        tile_src = n_pad                        # single src step, whole row in VMEM
    else:
        tile_src = 256                          # matches the 256-wide v6e/v7x MXU
        n_pad = _round_up(n_total, tile_src)
    tile_dst = max(8, min(128, n_pad // 2))
    while n_pad % tile_dst:
        tile_dst -= 8

    # scatter per-type projections into global node order
    def scatter_global(col_lo):
        g = jnp.zeros((n_pad, hidden), jnp.float32)
        for ti, t in enumerate(node_types):
            idx = jnp.asarray(node_index_dict[t], dtype=jnp.int32)
            g = g.at[idx].set(proj_nodes[ti, :n_counts[t], col_lo:col_lo + hidden])
        return g

    def head_major(g):
        return g.reshape(n_pad, num_heads, head_dim).transpose(1, 0, 2)  # (H, N_pad, D)

    w1g = scatter_global(0)                        # residual (W1), lane-dense (N_pad, hidden)
    vg = head_major(scatter_global(hidden))        # values   (W2)
    qg = head_major(scatter_global(2 * hidden))    # queries  (W3)
    kg = head_major(scatter_global(3 * hidden))    # keys     (W4)

    # 3) per-(dst,src) edge features: host builds edge-id table + validity mask,
    #    XLA gathers once into a dense bf16 tensor the kernel streams in tiles.
    pieces = [jnp.zeros((1, hidden), jnp.float32)]   # row 0 = "no edge"
    offsets, off = {}, 1
    for ei, et in enumerate(edge_types):
        offsets[et] = off
        pieces.append(proj_edges[ei, :e_counts[et], :])
        off += e_counts[et]
    e_all = jnp.concatenate(pieces, axis=0)

    edge_id = np.zeros((n_pad, n_pad), dtype=np.int32)
    mask = np.zeros((n_pad, n_pad), dtype=np.float32)
    for t in node_types:
        for g_i in node_index_dict[t]:
            for j in range(A_np.shape[1]):
                if A_np[g_i, j] == 0:
                    continue
                nb_t, _ = _find_node_type(j, node_index_dict)
                e_t, e_loc = _find_edge_type((int(g_i), int(j)), edge_index_dict)
                if nb_t is None or e_t is None:
                    continue
                edge_id[g_i, j] = offsets[e_t] + e_loc
                mask[g_i, j] = 1.0

    # TODO(synk): for large sparse graphs replace this dense O(N^2*hidden) gather
    # with an in-kernel gather of e_all driven by a scalar-prefetched edge-id
    # table (keeps HBM traffic O(E)); dense-but-VMEM-tiled bf16 suffices here.
    e_dense = (e_all[jnp.asarray(edge_id)]                     # (N_pad, N_pad, hidden)
               .reshape(n_pad, n_pad, num_heads, head_dim)
               .transpose(2, 0, 3, 1)                          # (H, N_dst, D, N_src) lane-dense
               .astype(jnp.bfloat16))                          # half the HBM stream

    # 4) attention / aggregation hot path
    out_flat = pallas_attention(qg, kg, vg, e_dense, jnp.asarray(mask), w1g,
                                tile_dst=tile_dst, tile_src=tile_src)

    out = {}
    for t in node_types:
        idx = jnp.asarray(node_index_dict[t], dtype=jnp.int32)
        out[t] = out_flat[idx]
    return out


# ----------------------------------------------------------------------------
# NumPy reference (literal transcription of the PyTorch forward)
# ----------------------------------------------------------------------------
def reference_forward(X, node_index_dict, A, E, edge_index_dict, params,
                      num_heads, head_dim):
    hidden = num_heads * head_dim

    def lin(x, wb):
        w, b = np.asarray(wb[0]), np.asarray(wb[1])
        return np.asarray(x) @ w.T + b

    w1f = {t: lin(X[t], params["W1"][t]).reshape(-1, num_heads, head_dim) for t in X}
    w2f = {t: lin(X[t], params["W2"][t]).reshape(-1, num_heads, head_dim) for t in X}
    w3f = {t: lin(X[t], params["W3"][t]).reshape(-1, num_heads, head_dim) for t in X}
    w4f = {t: lin(X[t], params["W4"][t]).reshape(-1, num_heads, head_dim) for t in X}
    w5f = {et: lin(E[et], params["W5"][et]).reshape(-1, num_heads, head_dim) for et in E}

    A_np = np.asarray(A)
    out = {}
    for t in w1f:
        n = w1f[t].shape[0]
        agg = np.zeros_like(w1f[t])
        for i in range(n):
            g_i = node_index_dict[t][i]
            aw, nc = [], []
            for j in range(A_np.shape[1]):
                if A_np[g_i, j] != 0:
                    nb_t, nb_loc = _find_node_type(j, node_index_dict)
                    e_t, e_loc = _find_edge_type((int(g_i), int(j)), edge_index_dict)
                    if nb_t is not None and e_t is not None:
                        q = w3f[t][i]
                        k = w4f[nb_t][nb_loc]
                        v = w2f[nb_t][nb_loc]
                        ef = w5f[e_t][e_loc]
                        score = np.sum(q * (k + ef), axis=-1) / head_dim ** 0.5
                        aw.append(score)
                        nc.append(v + ef)
            if aw:
                aw = np.stack(aw, axis=0)
                aw = np.exp(aw - aw.max(axis=0, keepdims=True))
                aw = aw / aw.sum(axis=0, keepdims=True)
                nc = np.stack(nc, axis=0)
                agg[i] = np.sum(aw[..., None] * nc, axis=0)
        out[t] = (w1f[t] + agg).reshape(n, hidden)
    return out


# ----------------------------------------------------------------------------
if __name__ == "__main__":
    num_heads, head_dim = 4, 32
    hidden = num_heads * head_dim
    node_types = ["OBSTACLE", "AGENT"]
    edge_types = ["NEAR", "FAR"]

    key = jax.random.PRNGKey(0)

    params = {"W1": {}, "W2": {}, "W3": {}, "W4": {}, "W5": {}}
    for name in ("W1", "W2", "W3", "W4"):
        for t in node_types:
            key, k1, k2 = jax.random.split(key, 3)
            params[name][t] = (
                jax.random.normal(k1, (hidden, hidden), jnp.float32) / np.sqrt(hidden),
                jax.random.normal(k2, (hidden,), jnp.float32) * 0.01,
            )
    for et in edge_types:
        key, k1, k2 = jax.random.split(key, 3)
        params["W5"][et] = (
            jax.random.normal(k1, (hidden, hidden), jnp.float32) / np.sqrt(hidden),
            jax.random.normal(k2, (hidden,), jnp.float32) * 0.01,
        )

    # small heterogeneous graph: 3 OBSTACLE + 3 AGENT nodes, interleaved globals
    node_index_dict = {"OBSTACLE": [0, 2, 4], "AGENT": [1, 3, 5]}
    key, kx1, kx2 = jax.random.split(key, 3)
    X = {
        "OBSTACLE": jax.random.normal(kx1, (3, hidden), jnp.float32),
        "AGENT": jax.random.normal(kx2, (3, hidden), jnp.float32),
    }

    edge_index_dict = {
        "NEAR": [(0, 1), (1, 0), (2, 3), (3, 2)],
        "FAR": [(4, 5), (0, 3), (4, 1)],
    }
    key, ke1, ke2 = jax.random.split(key, 3)
    E = {
        "NEAR": jax.random.normal(ke1, (4, hidden), jnp.float32),
        "FAR": jax.random.normal(ke2, (3, hidden), jnp.float32),
    }

    n_total = 6
    A = np.zeros((n_total, n_total), np.float32)
    for lst in edge_index_dict.values():
        for (i, j) in lst:
            A[i, j] = 1.0
    A[2, 5] = 1.0  # adjacency entry with no typed edge -> skipped (as in reference)
    # node 5 has no valid outgoing edges -> exercises the "no neighbors" path

    out = hetero_attention_forward(
        X, node_index_dict, A, E, edge_index_dict, params, num_heads, head_dim
    )
    for t in out:
        jax.block_until_ready(out[t])

    ref = reference_forward(
        X, node_index_dict, A, E, edge_index_dict, params, num_heads, head_dim
    )
    # bf16 MXU operands / bf16 edge-feature storage (f32 accumulation) ->
    # relaxed tolerance vs the f32 reference.
    for t in node_types:
        np.testing.assert_allclose(np.asarray(out[t]), ref[t], rtol=5e-2, atol=5e-2)

    print("KERNEL_OK")
</pallas_src>

<mosaic_0001>
module attributes {stable_mosaic.version = 11 : i64} {
  func.func @_fused_linear_kernel(%arg0: i32, %arg1: i32, %arg2: memref<1x16x128xbf16, #tpu.memory_space<vmem>>, %arg3: memref<1x128x512xbf16, #tpu.memory_space<vmem>>, %arg4: memref<1x1x512xf32, #tpu.memory_space<vmem>>, %arg5: memref<1x16x512xf32, #tpu.memory_space<vmem>>) attributes {dimension_semantics = [#tpu.dimension_semantics<parallel>, #tpu.dimension_semantics<parallel>], iteration_bounds = array<i64: 2, 1>, scalar_prefetch = 0 : i64, scratch_operands = 0 : i64, tpu.core_type = #tpu.core_type<tc>, window_params = [{transform_indices = @transform_0, window_bounds = array<i64: 1, 16, 128>}, {transform_indices = @transform_1, window_bounds = array<i64: 1, 128, 512>}, {transform_indices = @transform_2, window_bounds = array<i64: 1, 1, 512>}, {transform_indices = @transform_3, window_bounds = array<i64: 1, 16, 512>}]} {
    %c0 = arith.constant 0 : index
    %c0_0 = arith.constant 0 : index
    %c0_1 = arith.constant 0 : index
    %0 = vector.load %arg2[%c0, %c0_0, %c0_1] : memref<1x16x128xbf16, #tpu.memory_space<vmem>>, vector<1x16x128xbf16>
    %1 = vector.shape_cast %0 : vector<1x16x128xbf16> to vector<16x128xbf16>
    %c0_2 = arith.constant 0 : index
    %c0_3 = arith.constant 0 : index
    %c0_4 = arith.constant 0 : index
    %2 = vector.load %arg3[%c0_2, %c0_3, %c0_4] : memref<1x128x512xbf16, #tpu.memory_space<vmem>>, vector<1x128x512xbf16>
    %3 = vector.shape_cast %2 : vector<1x128x512xbf16> to vector<128x512xbf16>
    %cst = arith.constant dense<0.000000e+00> : vector<16x512xf32>
    %4 = tpu.matmul %1, %3, %cst {dimension_numbers = #tpu.dot_dimension_numbers<[1], [0], [0], [1], [0, 0, 1, 1], [], []>} : vector<16x128xbf16>, vector<128x512xbf16>, vector<16x512xf32> -> vector<16x512xf32>
    %c0_5 = arith.constant 0 : index
    %c0_6 = arith.constant 0 : index
    %c0_7 = arith.constant 0 : index
    %5 = vector.load %arg4[%c0_5, %c0_6, %c0_7] : memref<1x1x512xf32, #tpu.memory_space<vmem>>, vector<1x1x512xf32>
    %6 = vector.shape_cast %5 : vector<1x1x512xf32> to vector<1x512xf32>
    %7 = vector.broadcast %6 : vector<1x512xf32> to vector<16x512xf32>
    %8 = arith.addf %4, %7 : vector<16x512xf32>
    %c0_8 = arith.constant 0 : index
    %c0_9 = arith.constant 0 : index
    %c0_10 = arith.constant 0 : index
    %9 = vector.load %arg5[%c0_8, %c0_9, %c0_10] : memref<1x16x512xf32, #tpu.memory_space<vmem>>, vector<1x16x512xf32>
    %10 = vector.shape_cast %9 : vector<1x16x512xf32> to vector<16x512xf32>
    %11 = vector.shape_cast %8 : vector<16x512xf32> to vector<1x16x512xf32>
    tpu.vector_store %arg5[%c0_8, %c0_9, %c0_10], %11 {strides = array<i32>} : memref<1x16x512xf32, #tpu.memory_space<vmem>>, vector<1x16x512xf32>,
    return
  }
  func.func @transform_0(%arg0: i32, %arg1: i32) -> (i32, i32, i32) {
    %c0_i32 = arith.constant 0 : i32
    %c0_i32_0 = arith.constant 0 : i32
    return %arg0, %arg1, %c0_i32 : i32, i32, i32
  }
  func.func @transform_1(%arg0: i32, %arg1: i32) -> (i32, i32, i32) {
    %c0_i32 = arith.constant 0 : i32
    %c0_i32_0 = arith.constant 0 : i32
    %c0_i32_1 = arith.constant 0 : i32
    return %arg0, %c0_i32, %c0_i32_0 : i32, i32, i32
  }
  func.func @transform_2(%arg0: i32, %arg1: i32) -> (i32, i32, i32) {
    %c0_i32 = arith.constant 0 : i32
    %c0_i32_0 = arith.constant 0 : i32
    %c0_i32_1 = arith.constant 0 : i32
    return %arg0, %c0_i32, %c0_i32_0 : i32, i32, i32
  }
  func.func @transform_3(%arg0: i32, %arg1: i32) -> (i32, i32, i32) {
    %c0_i32 = arith.constant 0 : i32
    %c0_i32_0 = arith.constant 0 : i32
    return %arg0, %arg1, %c0_i32 : i32, i32, i32
  }
}

</mosaic_0001>

<llo_original>
// kernel: tpu_custom_call.1
$region0: #{tpu_custom_call.1}
  #allocation0 [shape = 'u32[]', space=smem, size = 0x4, offset = 0x4, fixed_abs, tag = 'smem constant byte address 0x4 - core index']
  #allocation1 [shape = 'u32[72,128]{1,0:T(1,128)}', space=vmem, size = 0x9000, scoped, tag = 'internal scratch']
  %s0 = inlined_call_operand.hbm [shape: bf16[2,16,128], index: 0, kind: input, shape index: {}]
  %s1 = inlined_call_operand.hbm [shape: bf16[2,128,512], index: 1, kind: input, shape index: {}]
  %s2 = inlined_call_operand.hbm [shape: f32[2,1,512], index: 2, kind: input, shape index: {}]
  %s3 = inlined_call_operand.hbm [shape: f32[2,16,512], index: 3, kind: output, shape index: {}]
  %s4 = sld [smem:[#allocation0]]
  $region57: #{tpu_custom_call.1} parent=0
    _
  %s6 = ssub.s32 1, %s4
  %s7 = scalar_select 0, %s6, %s4
  $region1: #{tpu_custom_call.1} parent=0
    #allocation2 [shape = 'u8[8192]{0}', space=vmem, size = 0x2000, scoped, tag = 'input window, operand 0']
    #allocation3 [shape = 's32[2]{0}', space=sflag, size = 0x8, scoped, tag = 'scoped memory for tpu_custom_call.1']
    #allocation4 [shape = 's32[2]{0}', space=sflag, size = 0x8, scoped, tag = 'scoped memory for tpu_custom_call.1']
    #allocation5 [shape = 'u8[262144]{0}', space=vmem, size = 0x40000, scoped, tag = 'input window, operand 1']
    #allocation6 [shape = 's32[2]{0}', space=sflag, size = 0x8, scoped, tag = 'scoped memory for tpu_custom_call.1']
    #allocation7 [shape = 'u8[4096]{0}', space=vmem, size = 0x1000, scoped, tag = 'input window, operand 2']
    #allocation8 [shape = 'u8[65536]{0}', space=vmem, size = 0x10000, scoped, tag = 'output window, operand 0']
    %8 = vsyncpa [#allocation3], 0
    %s9 = scalar_lea.sflag [#allocation3], 1
    %10 = vsyncpa %s9, 0
    %11 = vsyncpa [#allocation6], 0
    %s12 = scalar_lea.sflag [#allocation6], 1
    %13 = vsyncpa %s12, 0
    %14 = vsyncpa [#allocation4], 0
    %s15 = scalar_lea.sflag [#allocation4], 1
    %16 = vsyncpa %s15, 0
    loop: start=0, step=1, limit=4
    $region2: #{tpu_custom_call.1} parent=1 // loop_pre_header
      _
    $region3: #{tpu_custom_call.1} parent=1 // loop_header
      %s18 = sphi 0, %s22
      %p19 = scmp.ge.s32.totalorder %s18, 4
      %s25 = sphi 0, %s37
      %s26 = sphi 0, %s33
      %s27 = sphi 0, %s25
      %s28 = sphi 0, %s26
      %s29 = sphi 0, %s27
      %s30 = sphi 0, %s28
      %s42 = sphi 0, %s44
      %s45 = sphi 0, %s42
      %s46 = sphi 0, %s45
      %s62 = sphi 0, %s46
      %s68 = sphi 0, %s70
      %s71 = sphi 0, %s68
      %s72 = sphi 0, %s71
      %s88 = sphi 0, %s72
      %s94 = sphi 0, %s96
      %s97 = sphi 0, %s94
      %s98 = sphi 0, %s97
      %s114 = sphi 0, %s98
      %s122 = sphi 0, %s124
      %s125 = sphi 0, %s122
      %s126 = sphi 0, %s125
      %s142 = sphi 0, %s126
    $region4: #{tpu_custom_call.1} parent=1 // loop_header_branch
      %21 = sbr.rel (%p19) target = $region8
    $region5: #{tpu_custom_call.1} parent=1 // loop_body
      %s23 = ssub.s32 %s18, 1
      %s24 = ssub.s32 %s18, 2
      %s31 = sadd.s32 1, %s26
      %p32 = scmp.ge.s32.totalorder %s31, 1
      %s33 = scalar_select %p32, 0, %s31
      %s34 = sadd.s32 1, %s25
      %s35 = scalar_select %p32, %s34, %s25
      %p36 = scmp.ge.s32.totalorder %s35, 2
      %s37 = scalar_select %p36, 0, %s35
      %s38 = ssub.s32 %s25, %s37
      %s39 = ssub.s32 %s26, %s33
      %s40 = sor.u32 %s38, %s39
      %p41 = scmp.eq.s32.totalorder %s40, 0
      %s43 = sadd.s32 %s42, 1
      %s44 = scalar_select %p41, %s42, %s43
      %p47 = pneg %p41
      %p48 = scmp.eq.s32.totalorder %s18, 1
      %p49 = por %p47, %p48
      %p50 = scmp.ne.s32.totalorder %s42, %s45
      %p51 = scmp.eq.s32.totalorder %s18, 0
      %p52 = por %p50, %p51
      %p53 = scmp.ne.s32.totalorder %s42, %s45
      %p54 = scmp.eq.s32.totalorder %s23, 1
      %p55 = por %p53, %p54
      %p56 = scmp.ne.s32.totalorder %s45, %s46
      %p57 = scmp.eq.s32.totalorder %s23, 0
      %p58 = por %p56, %p57
      %p59 = scmp.ne.s32.totalorder %s45, %s46
      %p60 = scmp.eq.s32.totalorder %s24, 1
      %p61 = por %p59, %p60
      %p63 = scmp.ne.s32.totalorder %s46, %s62
      %p64 = scmp.eq.s32.totalorder %s24, 0
      %p65 = por %p63, %p64
      %s66 = ssub.s32 %s25, %s37
      %p67 = scmp.eq.s32.totalorder %s66, 0
      %s69 = sadd.s32 %s68, 1
      %s70 = scalar_select %p67, %s68, %s69
      %p73 = pneg %p67
      %p74 = scmp.eq.s32.totalorder %s18, 1
      %p75 = por %p73, %p74
      %p76 = scmp.ne.s32.totalorder %s68, %s71
      %p77 = scmp.eq.s32.totalorder %s18, 0
      %p78 = por %p76, %p77
      %p79 = scmp.ne.s32.totalorder %s68, %s71
      %p80 = scmp.eq.s32.totalorder %s23, 1
      %p81 = por %p79, %p80
      %p82 = scmp.ne.s32.totalorder %s71, %s72
      %p83 = scmp.eq.s32.totalorder %s23, 0
      %p84 = por %p82, %p83
      %p85 = scmp.ne.s32.totalorder %s71, %s72
      %p86 = scmp.eq.s32.totalorder %s24, 1
      %p87 = por %p85, %p86
      %p89 = scmp.ne.s32.totalorder %s72, %s88
      %p90 = scmp.eq.s32.totalorder %s24, 0
      %p91 = por %p89, %p90
      %s92 = ssub.s32 %s25, %s37
      %p93 = scmp.eq.s32.totalorder %s92, 0
      %s95 = sadd.s32 %s94, 1
      %s96 = scalar_select %p93, %s94, %s95
      %p99 = pneg %p93
      %p100 = scmp.eq.s32.totalorder %s18, 1
      %p101 = por %p99, %p100
      %p102 = scmp.ne.s32.totalorder %s94, %s97
      %p103 = scmp.eq.s32.totalorder %s18, 0
      %p104 = por %p102, %p103
      %p105 = scmp.ne.s32.totalorder %s94, %s97
      %p106 = scmp.eq.s32.totalorder %s23, 1
      %p107 = por %p105, %p106
      %p108 = scmp.ne.s32.totalorder %s97, %s98
      %p109 = scmp.eq.s32.totalorder %s23, 0
      %p110 = por %p108, %p109
      %p111 = scmp.ne.s32.totalorder %s97, %s98
      %p112 = scmp.eq.s32.totalorder %s24, 1
      %p113 = por %p111, %p112
      %p115 = scmp.ne.s32.totalorder %s98, %s114
      %p116 = scmp.eq.s32.totalorder %s24, 0
      %p117 = por %p115, %p116
      %s118 = ssub.s32 %s25, %s37
      %s119 = ssub.s32 %s26, %s33
      %s120 = sor.u32 %s118, %s119
      %p121 = scmp.eq.s32.totalorder %s120, 0
      %s123 = sadd.s32 %s122, 1
      %s124 = scalar_select %p121, %s122, %s123
      %p127 = pneg %p121
      %p128 = scmp.eq.s32.totalorder %s18, 1
      %p129 = por %p127, %p128
      %p130 = scmp.ne.s32.totalorder %s122, %s125
      %p131 = scmp.eq.s32.totalorder %s18, 0
      %p132 = por %p130, %p131
      %p133 = scmp.ne.s32.totalorder %s122, %s125
      %p134 = scmp.eq.s32.totalorder %s23, 1
      %p135 = por %p133, %p134
      %p136 = scmp.ne.s32.totalorder %s125, %s126
      %p137 = scmp.eq.s32.totalorder %s23, 0
      %p138 = por %p136, %p137
      %p139 = scmp.ne.s32.totalorder %s125, %s126
      %p140 = scmp.eq.s32.totalorder %s24, 1
      %p141 = por %p139, %p140
      %p143 = scmp.ne.s32.totalorder %s126, %s142
      %p144 = scmp.eq.s32.totalorder %s24, 0
      %p145 = por %p143, %p144
      %p146 = scmp.le.s32.totalorder 1, %s18
      %p147 = scmp.lt.s32.totalorder %s18, 3
      %p148 = pnand %p146, %p147
      %p149 = pneg %p148
      // Predicated region
      $region9: #{tpu_custom_call.1} parent=5 // pred_check
        _
      $region10: #{tpu_custom_call.1} parent=5 // pred_check_branch
        %151 = sbr.rel (%p148) target = $region12
      $region11: #{tpu_custom_call.1} parent=5 // pred_region
        %s152 = ssub.s32 %s18, 1
      $region12: #{tpu_custom_call.1} parent=5 // pred_fallthru
        _
      %p153 = scmp.lt.s32.totalorder %s18, 2
      // Predicated region
      $region13: #{tpu_custom_call.1} parent=5 // pred_check
        %p154 = pneg %p153
      $region14: #{tpu_custom_call.1} parent=5 // pred_check_branch
        %156 = sbr.rel (%p154) target = $region16
      $region15: #{tpu_custom_call.1} parent=5 // pred_region
        // Predicated region
        $region17: #{tpu_custom_call.1} parent=15 // pred_check
          %p157 = pneg %p52
        $region18: #{tpu_custom_call.1} parent=15 // pred_check_branch
          %159 = sbr.rel (%p157) target = $region20
        $region19: #{tpu_custom_call.1} parent=15 // pred_region
          %s160 = sand.u32 %s42, 1
          %s161 = scalar_lea.sflag [#allocation3], %s160
          %s162 = sand.u32 %s42, 1
          %s163 = smul.addr %s162, 8
          %s164 = scalar_lea.vmem [#allocation2], %s163
          %s165 = smul.u32 2, %s26
          %167 = vsyncadd %s161, 0
          %s168 = smul.addr %s25, 2
          %s169 = sadd.s32 %s165, %s168
          %s170 = smul.addr %s169, 4
          %s171 = scalar_lea.hbm %s0, %s170
          %s172 = sshll.u32 %s171, 4
          %s173 = int_to_ptr.hbm [resolvable:$true] %s172
          %s174 = sshll.u32 %s164, 4
          %s175 = int_to_ptr.vmem [resolvable:$true] %s174
          %180 = dma.hbm_to_vmem [thread:$0]  %s173, 128, %s175, %s161, 64, 64, 4
        $region20: #{tpu_custom_call.1} parent=15 // pred_fallthru
          _
        // Predicated region
        $region21: #{tpu_custom_call.1} parent=15 // pred_check
          %p181 = pneg %p78
        $region22: #{tpu_custom_call.1} parent=15 // pred_check_branch
          %183 = sbr.rel (%p181) target = $region24
        $region23: #{tpu_custom_call.1} parent=15 // pred_region
          %s184 = sand.u32 %s18, 1
          %s185 = scalar_lea.sflag [#allocation6], %s184
          %s186 = sand.u32 %s68, 1
          %s187 = smul.addr %s186, 256
          %s188 = scalar_lea.vmem [#allocation5], %s187
          %190 = vsyncadd %s185, 0
          %s191 = smul.addr %s25, 64
          %s192 = smul.addr %s191, 4
          %s193 = scalar_lea.hbm %s1, %s192
          %s194 = sshll.u32 %s193, 4
          %s195 = int_to_ptr.hbm [resolvable:$true] %s194
          %s196 = sshll.u32 %s188, 4
          %s197 = int_to_ptr.vmem [resolvable:$true] %s196
          %202 = dma.hbm_to_vmem [thread:$0]  %s195, 4096, %s197, %s185, 256, 256, 16
        $region24: #{tpu_custom_call.1} parent=15 // pred_fallthru
          _
        // Predicated region
        $region25: #{tpu_custom_call.1} parent=15 // pred_check
          %p203 = pneg %p104
        $region26: #{tpu_custom_call.1} parent=15 // pred_check_branch
          %205 = sbr.rel (%p203) target = $region28
        $region27: #{tpu_custom_call.1} parent=15 // pred_region
          %s206 = sand.u32 %s18, 1
          %s207 = scalar_lea.sflag [#allocation6], %s206
          %s208 = sand.u32 %s94, 1
          %s209 = smul.addr %s208, 4
          %s210 = scalar_lea.vmem [#allocation7], %s209
          %212 = vsyncadd %s207, 0
          %s213 = smul.addr %s25, 4
          %s214 = scalar_lea.hbm %s2, %s213
          %s216 = sshll.u32 %s214, 4
          %s217 = int_to_ptr.hbm [resolvable:$true] %s216
          %s218 = sshll.u32 %s210, 4
          %s219 = int_to_ptr.vmem [resolvable:$true] %s218
          %221 = dma.hbm_to_vmem [thread:$0]  %s217, 64, %s219, %s207
        $region28: #{tpu_custom_call.1} parent=15 // pred_fallthru
          _
      $region16: #{tpu_custom_call.1} parent=5 // pred_fallthru
        _
      %p222 = scmp.le.s32.totalorder 1, %s18
      %p223 = scmp.lt.s32.totalorder %s18, 3
      %p224 = pnand %p222, %p223
      %p225 = pneg %p224
      // Predicated region
      $region29: #{tpu_custom_call.1} parent=5 // pred_check
        _
      $region30: #{tpu_custom_call.1} parent=5 // pred_check_branch
        %227 = sbr.rel (%p224) target = $region32
      $region31: #{tpu_custom_call.1} parent=5 // pred_region
        %s228 = ssub.s32 %s18, 1
        %s229 = sand.u32 %s45, 1
        %s230 = scalar_lea.sflag [#allocation3], %s229
        %s231 = sand.u32 %s45, 1
        %s232 = smul.addr %s231, 8
        %s233 = scalar_lea.vmem [#allocation2], %s232
        // Predicated region
        $region33: #{tpu_custom_call.1} parent=31 // pred_check
          %p234 = pneg %p58
        $region34: #{tpu_custom_call.1} parent=31 // pred_check_branch
          %236 = sbr.rel (%p234) target = $region36
        $region35: #{tpu_custom_call.1} parent=31 // pred_region
          %238 = dma.done %s230, 128
        $region36: #{tpu_custom_call.1} parent=31 // pred_fallthru
          _
        %s239 = sand.u32 %s23, 1
        %s240 = scalar_lea.sflag [#allocation6], %s239
        %s241 = sand.u32 %s71, 1
        %s242 = smul.addr %s241, 256
        %s243 = scalar_lea.vmem [#allocation5], %s242
        // Predicated region
        $region37: #{tpu_custom_call.1} parent=31 // pred_check
          %p244 = pneg %p84
        $region38: #{tpu_custom_call.1} parent=31 // pred_check_branch
          %246 = sbr.rel (%p244) target = $region40
        $region39: #{tpu_custom_call.1} parent=31 // pred_region
          %248 = dma.done %s240, 4096
        $region40: #{tpu_custom_call.1} parent=31 // pred_fallthru
          _
        %s249 = sand.u32 %s23, 1
        %s250 = scalar_lea.sflag [#allocation6], %s249
        %s251 = sand.u32 %s97, 1
        %s252 = smul.addr %s251, 4
        %s253 = scalar_lea.vmem [#allocation7], %s252
        // Predicated region
        $region41: #{tpu_custom_call.1} parent=31 // pred_check
          %p254 = pneg %p110
        $region42: #{tpu_custom_call.1} parent=31 // pred_check_branch
          %256 = sbr.rel (%p254) target = $region44
        $region43: #{tpu_custom_call.1} parent=31 // pred_region
          %258 = dma.done %s250, 64
        $region44: #{tpu_custom_call.1} parent=31 // pred_fallthru
          _
        %s259 = sand.u32 %s45, 1
        %s260 = scalar_lea.sflag [#allocation3], %s259
        %s261 = sand.u32 %s45, 1
        %s262 = smul.addr %s261, 8
        %s263 = scalar_lea.vmem [#allocation2], %s262
        %p264 = pneg %p58
        %p265 = pneg %p55
        %s266 = sand.u32 %s23, 1
        %s267 = scalar_lea.sflag [#allocation6], %s266
        %s268 = sand.u32 %s71, 1
        %s269 = smul.addr %s268, 256
        %s270 = scalar_lea.vmem [#allocation5], %s269
        %p271 = pneg %p84
        %p272 = pneg %p81
        %s273 = sand.u32 %s23, 1
        %s274 = scalar_lea.sflag [#allocation6], %s273
        %s275 = sand.u32 %s97, 1
        %s276 = smul.addr %s275, 4
        %s277 = scalar_lea.vmem [#allocation7], %s276
        %p278 = pneg %p110
        %p279 = pneg %p107
        %p280 = pneg %p138
        %p281 = pneg %p135
        %s282 = sand.u32 %s125, 1
        %s283 = scalar_lea.sflag [#allocation4], %s282
        %s284 = sand.u32 %s125, 1
        %s285 = smul.addr %s284, 64
        %s286 = scalar_lea.vmem [#allocation8], %s285
        %s287 = smul.u32 2, %s28
        %s288 = smul.u32 2, %s28
        %v289 = vld [vmem:[%s233] sm:$0xf]
        %v290 = vld [vmem:[%s233 + $0x4] sm:$0xf]
        %v291 = vld [vmem:[%s243] sm:$0xff]
        %v292 = vld [vmem:[%s243 + $0x8] sm:$0xff]
        %v293 = vld [vmem:[%s243 + $0x10] sm:$0xff]
        %v294 = vld [vmem:[%s243 + $0x18] sm:$0xff]
        %v295 = vld [vmem:[%s243 + $0x20] sm:$0xff]
        %v296 = vld [vmem:[%s243 + $0x28] sm:$0xff]
        %v297 = vld [vmem:[%s243 + $0x30] sm:$0xff]
        %v298 = vld [vmem:[%s243 + $0x38] sm:$0xff]
        %v299 = vld [vmem:[%s243 + $0x40] sm:$0xff]
        %v300 = vld [vmem:[%s243 + $0x48] sm:$0xff]
        %v301 = vld [vmem:[%s243 + $0x50] sm:$0xff]
        %v302 = vld [vmem:[%s243 + $0x58] sm:$0xff]
        %v303 = vld [vmem:[%s243 + $0x60] sm:$0xff]
        %v304 = vld [vmem:[%s243 + $0x68] sm:$0xff]
        %v305 = vld [vmem:[%s243 + $0x70] sm:$0xff]
        %v306 = vld [vmem:[%s243 + $0x78] sm:$0xff]
        %v307 = vld [vmem:[%s243 + $0x80] sm:$0xff]
        %v308 = vld [vmem:[%s243 + $0x88] sm:$0xff]
        %v309 = vld [vmem:[%s243 + $0x90] sm:$0xff]
        %v310 = vld [vmem:[%s243 + $0x98] sm:$0xff]
        %v311 = vld [vmem:[%s243 + $0xa0] sm:$0xff]
        %v312 = vld [vmem:[%s243 + $0xa8] sm:$0xff]
        %v313 = vld [vmem:[%s243 + $0xb0] sm:$0xff]
        %v314 = vld [vmem:[%s243 + $0xb8] sm:$0xff]
        %v315 = vld [vmem:[%s243 + $0xc0] sm:$0xff]
        %v316 = vld [vmem:[%s243 + $0xc8] sm:$0xff]
        %v317 = vld [vmem:[%s243 + $0xd0] sm:$0xff]
        %v318 = vld [vmem:[%s243 + $0xd8] sm:$0xff]
        %v319 = vld [vmem:[%s243 + $0xe0] sm:$0xff]
        %v320 = vld [vmem:[%s243 + $0xe8] sm:$0xff]
        %v321 = vld [vmem:[%s243 + $0xf0] sm:$0xff]
        %v322 = vld [vmem:[%s243 + $0xf8] sm:$0xff]
        %v323 = vld [vmem:[%s253] sm:$0xf]
        %v325 = vperm.slane %v323, 0
        %v326 = vperm.slane %v323, 1
        %v327 = vperm.slane %v323, 2
        %v328 = vperm.slane %v323, 3
        %v335 = vunpack.c.l.b16 %v289
        %v336 = vunpack.c.l.b16 %v290
        %v337 = vpack.c.b16 %v336, %v335
        %v371 = vunpack.c.l.b16 %v291
        %v372 = vunpack.c.h.b16 %v291
        %v373 = vunpack.c.l.b16 %v292
        %v374 = vunpack.c.h.b16 %v292
        %v375 = vunpack.c.l.b16 %v293
        %v376 = vunpack.c.h.b16 %v293
        %v377 = vunpack.c.l.b16 %v294
        %v378 = vunpack.c.h.b16 %v294
        %v379 = vunpack.c.l.b16 %v295
        %v380 = vunpack.c.h.b16 %v295
        %v381 = vunpack.c.l.b16 %v296
        %v382 = vunpack.c.h.b16 %v296
        %v383 = vunpack.c.l.b16 %v297
        %v384 = vunpack.c.h.b16 %v297
        %v385 = vunpack.c.l.b16 %v298
        %v386 = vunpack.c.h.b16 %v298
        %v387 = vunpack.c.l.b16 %v299
        %v388 = vunpack.c.h.b16 %v299
        %v389 = vunpack.c.l.b16 %v300
        %v390 = vunpack.c.h.b16 %v300
        %v391 = vunpack.c.l.b16 %v301
        %v392 = vunpack.c.h.b16 %v301
        %v393 = vunpack.c.l.b16 %v302
        %v394 = vunpack.c.h.b16 %v302
        %v395 = vunpack.c.l.b16 %v303
        %v396 = vunpack.c.h.b16 %v303
        %v397 = vunpack.c.l.b16 %v304
        %v398 = vunpack.c.h.b16 %v304
        %v399 = vunpack.c.l.b16 %v305
        %v400 = vunpack.c.h.b16 %v305
        %v401 = vunpack.c.l.b16 %v306
        %v402 = vunpack.c.h.b16 %v306
        %v403 = vunpack.c.l.b16 %v307
        %v404 = vunpack.c.h.b16 %v307
        %v405 = vunpack.c.l.b16 %v308
        %v406 = vunpack.c.h.b16 %v308
        %v407 = vunpack.c.l.b16 %v309
        %v408 = vunpack.c.h.b16 %v309
        %v409 = vunpack.c.l.b16 %v310
        %v410 = vunpack.c.h.b16 %v310
        %v411 = vunpack.c.l.b16 %v311
        %v412 = vunpack.c.h.b16 %v311
        %v413 = vunpack.c.l.b16 %v312
        %v414 = vunpack.c.h.b16 %v312
        %v415 = vunpack.c.l.b16 %v313
        %v416 = vunpack.c.h.b16 %v313
        %v417 = vunpack.c.l.b16 %v314
        %v418 = vunpack.c.h.b16 %v314
        %v419 = vunpack.c.l.b16 %v315
        %v420 = vunpack.c.h.b16 %v315
        %v421 = vunpack.c.l.b16 %v316
        %v422 = vunpack.c.h.b16 %v316
        %v423 = vunpack.c.l.b16 %v317
        %v424 = vunpack.c.h.b16 %v317
        %v425 = vunpack.c.l.b16 %v318
        %v426 = vunpack.c.h.b16 %v318
        %v427 = vunpack.c.l.b16 %v319
        %v428 = vunpack.c.h.b16 %v319
        %v429 = vunpack.c.l.b16 %v320
        %v430 = vunpack.c.h.b16 %v320
        %v431 = vunpack.c.l.b16 %v321
        %v432 = vunpack.c.h.b16 %v321
        %v433 = vunpack.c.l.b16 %v322
        %v434 = vunpack.c.h.b16 %v322
        %v435 = vpack.c.b16 %v375, %v371
        %v436 = vpack.c.b16 %v376, %v372
        %v437 = vpack.c.b16 %v377, %v373
        %v438 = vpack.c.b16 %v378, %v374
        %v439 = vpack.c.b16 %v383, %v379
        %v440 = vpack.c.b16 %v384, %v380
        %v441 = vpack.c.b16 %v385, %v381
        %v442 = vpack.c.b16 %v386, %v382
        %v443 = vpack.c.b16 %v391, %v387
        %v444 = vpack.c.b16 %v392, %v388
        %v445 = vpack.c.b16 %v393, %v389
        %v446 = vpack.c.b16 %v394, %v390
        %v447 = vpack.c.b16 %v399, %v395
        %v448 = vpack.c.b16 %v400, %v396
        %v449 = vpack.c.b16 %v401, %v397
        %v450 = vpack.c.b16 %v402, %v398
        %v451 = vpack.c.b16 %v407, %v403
        %v452 = vpack.c.b16 %v408, %v404
        %v453 = vpack.c.b16 %v409, %v405
        %v454 = vpack.c.b16 %v410, %v406
        %v455 = vpack.c.b16 %v415, %v411
        %v456 = vpack.c.b16 %v416, %v412
        %v457 = vpack.c.b16 %v417, %v413
        %v458 = vpack.c.b16 %v418, %v414
        %v459 = vpack.c.b16 %v423, %v419
        %v460 = vpack.c.b16 %v424, %v420
        %v461 = vpack.c.b16 %v425, %v421
        %v462 = vpack.c.b16 %v426, %v422
        %v463 = vpack.c.b16 %v431, %v427
        %v464 = vpack.c.b16 %v432, %v428
        %v465 = vpack.c.b16 %v433, %v429
        %v466 = vpack.c.b16 %v434, %v430
        %499 = vmatpush.bf16.msra.mxu0 %v463
        %500 = vmatpush.bf16.msra.mxu0 %v459
        %501 = vmatpush.bf16.msra.mxu0 %v455
        %502 = vmatpush.bf16.msra.mxu0 %v451
        %503 = vmatpush.bf16.msra.mxu0 %v447
        %504 = vmatpush.bf16.msra.mxu0 %v443
        %505 = vmatpush.bf16.msra.mxu0 %v439
        %506 = vmatpush.bf16.msra.mxu0 %v435
        %507 = vmatmul.bf16.gmra.mxu0 %v337
        %v508 = vpop.f32.mrf.mxu0
        %v509 = vadd.f32 %v325, %v508
        %v510 = vpop.f32.mrf.mxu0
        %v511 = vadd.f32 %v325, %v510
        %512 = vdwg.mxu0
        %513 = vmatpush.bf16.msra.mxu0 %v464
        %514 = vmatpush.bf16.msra.mxu0 %v460
        %515 = vmatpush.bf16.msra.mxu0 %v456
        %516 = vmatpush.bf16.msra.mxu0 %v452
        %517 = vmatpush.bf16.msra.mxu0 %v448
        %518 = vmatpush.bf16.msra.mxu0 %v444
        %519 = vmatpush.bf16.msra.mxu0 %v440
        %520 = vmatpush.bf16.msra.mxu0 %v436
        %521 = vmatmul.bf16.gmra.mxu0 %v337
        %v522 = vpop.f32.mrf.mxu0
        %v523 = vadd.f32 %v326, %v522
        %v524 = vpop.f32.mrf.mxu0
        %v525 = vadd.f32 %v326, %v524
        %526 = vdwg.mxu0
        %527 = vmatpush.bf16.msra.mxu0 %v465
        %528 = vmatpush.bf16.msra.mxu0 %v461
        %529 = vmatpush.bf16.msra.mxu0 %v457
        %530 = vmatpush.bf16.msra.mxu0 %v453
        %531 = vmatpush.bf16.msra.mxu0 %v449
        %532 = vmatpush.bf16.msra.mxu0 %v445
        %533 = vmatpush.bf16.msra.mxu0 %v441
        %534 = vmatpush.bf16.msra.mxu0 %v437
        %535 = vmatmul.bf16.gmra.mxu0 %v337
        %v536 = vpop.f32.mrf.mxu0
        %v537 = vadd.f32 %v327, %v536
        %v538 = vpop.f32.mrf.mxu0
        %v539 = vadd.f32 %v327, %v538
        %540 = vdwg.mxu0
        %541 = vmatpush.bf16.msra.mxu0 %v466
        %542 = vmatpush.bf16.msra.mxu0 %v462
        %543 = vmatpush.bf16.msra.mxu0 %v458
        %544 = vmatpush.bf16.msra.mxu0 %v454
        %545 = vmatpush.bf16.msra.mxu0 %v450
        %546 = vmatpush.bf16.msra.mxu0 %v446
        %547 = vmatpush.bf16.msra.mxu0 %v442
        %548 = vmatpush.bf16.msra.mxu0 %v438
        %549 = vmatmul.bf16.gmra.mxu0 %v337
        %v550 = vpop.f32.mrf.mxu0
        %v551 = vadd.f32 %v328, %v550
        %v552 = vpop.f32.mrf.mxu0
        %v553 = vadd.f32 %v328, %v552
        %554 = vdwg.mxu0
        %555 = vst [vmem:[%s286] sm:$0xff] %v509
        %556 = vst [vmem:[%s286 + $0x8] sm:$0xff] %v523
        %557 = vst [vmem:[%s286 + $0x10] sm:$0xff] %v537
        %558 = vst [vmem:[%s286 + $0x18] sm:$0xff] %v551
        %559 = vst [vmem:[%s286 + $0x20] sm:$0xff] %v511
        %560 = vst [vmem:[%s286 + $0x28] sm:$0xff] %v525
        %561 = vst [vmem:[%s286 + $0x30] sm:$0xff] %v539
        %562 = vst [vmem:[%s286 + $0x38] sm:$0xff] %v553
        %s563 = sand.u32 %s125, 1
        %s564 = scalar_lea.sflag [#allocation4], %s563
        %s565 = sand.u32 %s125, 1
        %s566 = smul.addr %s565, 64
        %s567 = scalar_lea.vmem [#allocation8], %s566
        // Predicated region
        $region45: #{tpu_custom_call.1} parent=31 // pred_check
          %p568 = pneg %p135
        $region46: #{tpu_custom_call.1} parent=31 // pred_check_branch
          %570 = sbr.rel (%p568) target = $region48
        $region47: #{tpu_custom_call.1} parent=31 // pred_region
          %s571 = smul.u32 2, %s28
          %573 = vsyncadd %s564, 0
          %s574 = smul.addr %s571, 4
          %s575 = smul.addr %s27, 8
          %s576 = sadd.s32 %s574, %s575
          %s577 = smul.addr %s576, 8
          %s578 = scalar_lea.hbm %s3, %s577
          %s579 = sshll.u32 %s567, 4
          %s580 = int_to_ptr.vmem [resolvable:$true] %s579
          %s581 = sshll.u32 %s578, 4
          %s582 = int_to_ptr.hbm [resolvable:$true] %s581
          %587 = dma.vmem_to_hbm [thread:$0]  %s580, 1024, %s582, %s564, 512, 512, 32
        $region48: #{tpu_custom_call.1} parent=31 // pred_fallthru
          _
      $region32: #{tpu_custom_call.1} parent=5 // pred_fallthru
        _
      %p588 = scmp.le.s32.totalorder 2, %s18
      // Predicated region
      $region49: #{tpu_custom_call.1} parent=5 // pred_check
        %p589 = pneg %p588
      $region50: #{tpu_custom_call.1} parent=5 // pred_check_branch
        %591 = sbr.rel (%p589) target = $region52
      $region51: #{tpu_custom_call.1} parent=5 // pred_region
        %s592 = ssub.s32 %s18, 2
        // Predicated region
        $region53: #{tpu_custom_call.1} parent=51 // pred_check
          %p593 = pneg %p141
        $region54: #{tpu_custom_call.1} parent=51 // pred_check_branch
          %595 = sbr.rel (%p593) target = $region56
        $region55: #{tpu_custom_call.1} parent=51 // pred_region
          %s596 = sand.u32 %s126, 1
          %s597 = scalar_lea.sflag [#allocation4], %s596
          %s598 = sand.u32 %s126, 1
          %s599 = smul.addr %s598, 64
          %s600 = scalar_lea.vmem [#allocation8], %s599
          %602 = dma.done %s597, 1024
        $region56: #{tpu_custom_call.1} parent=51 // pred_fallthru
          _
      $region52: #{tpu_custom_call.1} parent=5 // pred_fallthru
        _
    $region6: #{tpu_custom_call.1} parent=1 // loop_footer
      %s22 = sadd.s32 1, %s18
    $region7: #{tpu_custom_call.1} parent=1 // loop_footer_branch
      %17 = sbr.rel target = $region3
    $region8: #{tpu_custom_call.1} parent=1 // loop_exit
      _
    %603 = vsyncpa [#allocation3], 1
    %s604 = scalar_lea.sflag [#allocation3], 1
    %605 = vsyncpa %s604, 1
    %606 = vsyncpa [#allocation6], 1
    %s607 = scalar_lea.sflag [#allocation6], 1
    %608 = vsyncpa %s607, 1
    %609 = vsyncpa [#allocation4], 1
    %s610 = scalar_lea.sflag [#allocation4], 1
    %611 = vsyncpa %s610, 1

</llo_original>
